<compile_context>
chip_gen: v6e
topology: v6e:2x2x1
jax: 0.10.0
libtpu: 0.0.40
codegen_flags: <defaults>
</compile_context>

<pallas_src>
import jax
import jax.numpy as jnp
from jax.experimental import pallas as pl
from jax.experimental.pallas import tpu as pltpu


# ----------------------------------------------------------------------------
# Kernel
# ----------------------------------------------------------------------------
def _make_fused_kernel(n_layers, bias_offsets, bias_widths, out_dim):
    """Kernel for the fused (mu ++ logvar) MLP chain; emits mu and softplus(logvar)."""

    def kernel(*refs):
        x_ref = refs[0]
        w_refs = refs[1:1 + n_layers]
        b_ref = refs[1 + n_layers]
        mu_ref, var_ref = refs[-2], refs[-1]

        h = x_ref[...]
        if h.dtype != jnp.float32:          # only when bf16 HBM I/O is requested
            h = h.astype(jnp.float32)

        for layer in range(n_layers):       # statically unrolled
            w = w_refs[layer][...]          # fused (in_l, out_l), f32, VMEM-resident
            off = bias_offsets[layer]       # 128-lane aligned (segments are padded)
            wid = bias_widths[layer]
            b = b_ref[:, off:off + wid]     # (1, out_l), static slice
            h = jnp.dot(h, w, preferred_element_type=jnp.float32) + b
            if layer < n_layers - 1:
                h = jnp.maximum(h, 0.0)     # ReLU (VPU)

        # h: (tb, 2*out_dim) = [mu | logvar].
        mu = h[:, :out_dim]
        lv = h[:, out_dim:2 * out_dim]
        # Numerically stable softplus (matches F.softplus incl. large-x regime).
        var = jnp.maximum(lv, 0.0) + jnp.log1p(jnp.exp(-jnp.abs(lv)))

        mu_ref[...] = mu.astype(mu_ref.dtype)
        var_ref[...] = var.astype(var_ref.dtype)

    return kernel


# ----------------------------------------------------------------------------
# Parameter fusion
# ----------------------------------------------------------------------------
def _fuse_mlp_params(mu_params, lv_params):
    """Fuse two MLP parameter stacks into one lane-dense chain.

    Layer 0 weight is [W_mu | W_lv]; deeper layers are blkdiag(W_mu_l, W_lv_l).
    Per-layer fused biases are concatenated into a single row, with each segment
    padded to a multiple of 128 lanes so in-kernel slices start on vreg lane
    boundaries for any hidden width.
    """
    assert len(mu_params) == len(lv_params)
    n_layers = len(mu_params) // 2
    fused_ws, seg_bs = [], []
    for l in range(n_layers):
        w_mu, b_mu = mu_params[2 * l], mu_params[2 * l + 1]
        w_lv, b_lv = lv_params[2 * l], lv_params[2 * l + 1]
        if l == 0:
            w = jnp.concatenate([w_mu, w_lv], axis=1)                  # (in, 2h)
        else:
            z_tr = jnp.zeros((w_mu.shape[0], w_lv.shape[1]), w_mu.dtype)
            z_bl = jnp.zeros((w_lv.shape[0], w_mu.shape[1]), w_mu.dtype)
            w = jnp.concatenate(
                [jnp.concatenate([w_mu, z_tr], axis=1),
                 jnp.concatenate([z_bl, w_lv], axis=1)], axis=0)       # (2in, 2out)
        fused_ws.append(w)
        seg_bs.append(jnp.concatenate([b_mu, b_lv], axis=1))           # (1, 2out)

    offsets, widths, padded = [], [], []
    off = 0
    for b in seg_bs:
        wid = int(b.shape[1])
        pad = (-wid) % 128
        padded.append(jnp.pad(b, ((0, 0), (0, pad))) if pad else b)
        offsets.append(off)
        widths.append(wid)
        off += wid + pad
    bias_cat = jnp.concatenate(padded, axis=1)                         # (1, sum_padded)
    return fused_ws, bias_cat, tuple(offsets), tuple(widths)


# ----------------------------------------------------------------------------
# Tiling / wrapper
# ----------------------------------------------------------------------------
_MAX_BATCH_TILE = 2048  # keeps f32 activations + double-buffered I/O well under VMEM


def _round_up(n, m):
    return ((n + m - 1) // m) * m


def _choose_batch_tile(B, batch_tile):
    if batch_tile is not None:
        return max(8, min(_round_up(int(batch_tile), 8), _round_up(B, 8)))
    if B <= 256:
        return _round_up(B, 8)                       # whole batch in one step
    # >=2 grid steps so ("parallel",) feeds both v7x TensorCores; capped for VMEM.
    return min(_MAX_BATCH_TILE, _round_up(pl.cdiv(B, 2), 8))


def gaussian_mlp_forward(x, mu_params, lv_params, *, batch_tile=None, io_dtype=None):
    """x: (B, input_dim). *_params: flat [W1,b1,W2,b2,...], W as (in,out), b as (1,out).

    Returns (mu, var) with var = softplus(logvar_net(x)).
    io_dtype: optional HBM-facing dtype for x and the outputs (e.g. jnp.bfloat16);
    weights, accumulation and softplus stay f32 inside the kernel.
    """
    assert len(mu_params) == len(lv_params)
    n_layers = len(mu_params) // 2
    out_dim = int(mu_params[-1].shape[-1])
    B, in_dim = x.shape

    fused_ws, bias_cat, offsets, widths = _fuse_mlp_params(mu_params, lv_params)

    if io_dtype is not None and x.dtype != io_dtype:
        x = x.astype(io_dtype)
    out_dtype = io_dtype if io_dtype is not None else x.dtype

    tb = _choose_batch_tile(B, batch_tile)
    grid = (pl.cdiv(B, tb),)                 # ragged tail handled by Pallas edge blocks

    kernel = _make_fused_kernel(n_layers, offsets, widths, out_dim)

    in_specs = [pl.BlockSpec((tb, in_dim), lambda i: (i, 0))]
    for w in fused_ws:                       # constant index_map -> VMEM-resident, no re-DMA
        in_specs.append(pl.BlockSpec(w.shape, lambda i: (0, 0)))
    in_specs.append(pl.BlockSpec(bias_cat.shape, lambda i: (0, 0)))

    # mu / var come out directly in (B, out_dim) form: no wrapper pad/slice copies.
    out_specs = (pl.BlockSpec((tb, out_dim), lambda i: (i, 0)),
                 pl.BlockSpec((tb, out_dim), lambda i: (i, 0)))
    out_shape = (jax.ShapeDtypeStruct((B, out_dim), out_dtype),
                 jax.ShapeDtypeStruct((B, out_dim), out_dtype))

    mu, var = pl.pallas_call(
        kernel,
        grid=grid,
        in_specs=in_specs,
        out_specs=out_specs,
        out_shape=out_shape,
        compiler_params=pltpu.CompilerParams(
            dimension_semantics=("parallel",),          # shard batch across TCs (v7x)
            vmem_limit_bytes=48 * 1024 * 1024),         # above v5e's 16 MiB scoped default
    )(x, *fused_ws, bias_cat)
    return mu, var


# ----------------------------------------------------------------------------
# Parameter init + pure-JAX reference
# ----------------------------------------------------------------------------
def init_mlp_params(key, input_dim, hidden_dims, output_dim, dtype=jnp.float32):
    """Deterministic Linear-layer params. W stored as (in, out), b as (1, out)."""
    dims = [input_dim] + list(hidden_dims) + [output_dim]
    params = []
    for i in range(len(dims) - 1):
        key, kw, kb = jax.random.split(key, 3)
        fan_in, fan_out = dims[i], dims[i + 1]
        bound = 1.0 / jnp.sqrt(fan_in)
        w = jax.random.uniform(kw, (fan_in, fan_out), dtype, -bound, bound)
        b = jax.random.uniform(kb, (1, fan_out), dtype, -bound, bound)
        params.extend([w, b])
    return params, key


def reference_forward(x, mu_params, lv_params):
    """Pure-JAX reference for verification."""
    def mlp(h, params):
        n_layers = len(params) // 2
        for i in range(n_layers):
            h = h @ params[2 * i] + params[2 * i + 1]
            if i < n_layers - 1:
                h = jnp.maximum(h, 0.0)
        return h
    mu = mlp(x, mu_params)
    lv = mlp(x, lv_params)
    return mu, jax.nn.softplus(lv)


if __name__ == "__main__":
    # Shapes consistent with GaussianMLP(input_dim, hidden_dims, output_dim)
    batch = 8
    input_dim = 32
    hidden_dims = [64, 64]
    output_dim = 16

    key = jax.random.PRNGKey(0)
    key, kx = jax.random.split(key)
    x = jax.random.normal(kx, (batch, input_dim), dtype=jnp.float32)

    mu_params, key = init_mlp_params(key, input_dim, hidden_dims, output_dim)
    lv_params, key = init_mlp_params(key, input_dim, hidden_dims, output_dim)

    mu, var = gaussian_mlp_forward(x, mu_params, lv_params)
    jax.block_until_ready((mu, var))

    mu_ref, var_ref = reference_forward(x, mu_params, lv_params)
    assert mu.shape == (batch, output_dim) and var.shape == (batch, output_dim)
    assert jnp.allclose(mu, mu_ref, atol=1e-4, rtol=1e-4)
    assert jnp.allclose(var, var_ref, atol=1e-4, rtol=1e-4)
    assert bool(jnp.all(var >= 0.0))          # softplus output is non-negative

    # Larger, ragged batch: exercises the multi-step "parallel" grid and the
    # partial tail block (no wrapper-side padding / slicing copies).
    key, kx2 = jax.random.split(key)
    x_big = jax.random.normal(kx2, (1000, input_dim), dtype=jnp.float32)
    mu_b, var_b = gaussian_mlp_forward(x_big, mu_params, lv_params)
    jax.block_until_ready((mu_b, var_b))
    mu_br, var_br = reference_forward(x_big, mu_params, lv_params)
    assert jnp.allclose(mu_b, mu_br, atol=1e-4, rtol=1e-4)
    assert jnp.allclose(var_b, var_br, atol=1e-4, rtol=1e-4)

    # bf16 HBM I/O path (compute stays f32 in-kernel); looser tolerance for the
    # bf16 input/output quantization.
    mu_h, var_h = gaussian_mlp_forward(x_big, mu_params, lv_params,
                                       io_dtype=jnp.bfloat16)
    jax.block_until_ready((mu_h, var_h))
    x_q = x_big.astype(jnp.bfloat16).astype(jnp.float32)
    mu_qr, var_qr = reference_forward(x_q, mu_params, lv_params)
    assert jnp.allclose(mu_h.astype(jnp.float32), mu_qr, atol=5e-2, rtol=5e-2)
    assert jnp.allclose(var_h.astype(jnp.float32), var_qr, atol=5e-2, rtol=5e-2)

    print("KERNEL_OK")
</pallas_src>

<mosaic_0001>
module attributes {stable_mosaic.version = 11 : i64} {
  func.func @kernel(%arg0: i32, %arg1: memref<8x32xf32, #tpu.memory_space<vmem>>, %arg2: memref<32x128xf32, #tpu.memory_space<vmem>>, %arg3: memref<128x128xf32, #tpu.memory_space<vmem>>, %arg4: memref<128x32xf32, #tpu.memory_space<vmem>>, %arg5: memref<1x384xf32, #tpu.memory_space<vmem>>, %arg6: memref<8x16xf32, #tpu.memory_space<vmem>>, %arg7: memref<8x16xf32, #tpu.memory_space<vmem>>) attributes {dimension_semantics = [#tpu.dimension_semantics<parallel>], iteration_bounds = array<i64: 1>, scalar_prefetch = 0 : i64, scratch_operands = 0 : i64, tpu.core_type = #tpu.core_type<tc>, window_params = [{transform_indices = @transform_0, window_bounds = array<i64: 8, 32>}, {pipeline_mode = #tpu.pipeline_mode<synchronous>, transform_indices = @transform_1, window_bounds = array<i64: 32, 128>}, {pipeline_mode = #tpu.pipeline_mode<synchronous>, transform_indices = @transform_2, window_bounds = array<i64: 128, 128>}, {pipeline_mode = #tpu.pipeline_mode<synchronous>, transform_indices = @transform_3, window_bounds = array<i64: 128, 32>}, {pipeline_mode = #tpu.pipeline_mode<synchronous>, transform_indices = @transform_4, window_bounds = array<i64: 1, 384>}, {transform_indices = @transform_5, window_bounds = array<i64: 8, 16>}, {transform_indices = @transform_6, window_bounds = array<i64: 8, 16>}]} {
    %c0 = arith.constant 0 : index
    %c0_0 = arith.constant 0 : index
    %0 = vector.load %arg1[%c0, %c0_0] : memref<8x32xf32, #tpu.memory_space<vmem>>, vector<8x32xf32>
    %c0_1 = arith.constant 0 : index
    %c0_2 = arith.constant 0 : index
    %1 = vector.load %arg2[%c0_1, %c0_2] : memref<32x128xf32, #tpu.memory_space<vmem>>, vector<32x128xf32>
    %c0_3 = arith.constant 0 : index
    %c0_4 = arith.constant 0 : index
    %2 = vector.load %arg5[%c0_3, %c0_4] : memref<1x384xf32, #tpu.memory_space<vmem>>, vector<1x128xf32>
    %cst = arith.constant dense<0.000000e+00> : vector<8x128xf32>
    %3 = tpu.matmul %0, %1, %cst {dimension_numbers = #tpu.dot_dimension_numbers<[1], [0], [0], [1], [0, 0, 1, 1], [], []>} : vector<8x32xf32>, vector<32x128xf32>, vector<8x128xf32> -> vector<8x128xf32>
    %4 = vector.broadcast %2 : vector<1x128xf32> to vector<8x128xf32>
    %5 = arith.addf %3, %4 : vector<8x128xf32>
    %cst_5 = arith.constant 0.000000e+00 : f32
    %6 = vector.broadcast %cst_5 : f32 to vector<8x128xf32>
    %7 = arith.maximumf %5, %6 : vector<8x128xf32>
    %c0_6 = arith.constant 0 : index
    %c0_7 = arith.constant 0 : index
    %8 = vector.load %arg3[%c0_6, %c0_7] : memref<128x128xf32, #tpu.memory_space<vmem>>, vector<128x128xf32>
    %c0_8 = arith.constant 0 : index
    %c128 = arith.constant 128 : index
    %9 = vector.load %arg5[%c0_8, %c128] : memref<1x384xf32, #tpu.memory_space<vmem>>, vector<1x128xf32>
    %cst_9 = arith.constant dense<0.000000e+00> : vector<8x128xf32>
    %10 = tpu.matmul %7, %8, %cst_9 {dimension_numbers = #tpu.dot_dimension_numbers<[1], [0], [0], [1], [0, 0, 1, 1], [], []>} : vector<8x128xf32>, vector<128x128xf32>, vector<8x128xf32> -> vector<8x128xf32>
    %11 = vector.broadcast %9 : vector<1x128xf32> to vector<8x128xf32>
    %12 = arith.addf %10, %11 : vector<8x128xf32>
    %cst_10 = arith.constant 0.000000e+00 : f32
    %13 = vector.broadcast %cst_10 : f32 to vector<8x128xf32>
    %14 = arith.maximumf %12, %13 : vector<8x128xf32>
    %c0_11 = arith.constant 0 : index
    %c0_12 = arith.constant 0 : index
    %15 = vector.load %arg4[%c0_11, %c0_12] : memref<128x32xf32, #tpu.memory_space<vmem>>, vector<128x32xf32>
    %c0_13 = arith.constant 0 : index
    %c256 = arith.constant 256 : index
    %16 = vector.load %arg5[%c0_13, %c256] : memref<1x384xf32, #tpu.memory_space<vmem>>, vector<1x32xf32>
    %cst_14 = arith.constant dense<0.000000e+00> : vector<8x32xf32>
    %17 = tpu.matmul %14, %15, %cst_14 {dimension_numbers = #tpu.dot_dimension_numbers<[1], [0], [0], [1], [0, 0, 1, 1], [], []>} : vector<8x128xf32>, vector<128x32xf32>, vector<8x32xf32> -> vector<8x32xf32>
    %18 = vector.broadcast %16 : vector<1x32xf32> to vector<8x32xf32>
    %19 = arith.addf %17, %18 : vector<8x32xf32>
    %20 = vector.extract_strided_slice %19 {offsets = [0, 0], sizes = [8, 16], strides = [1, 1]} : vector<8x32xf32> to vector<8x16xf32>
    %21 = vector.extract_strided_slice %19 {offsets = [0, 16], sizes = [8, 16], strides = [1, 1]} : vector<8x32xf32> to vector<8x16xf32>
    %cst_15 = arith.constant 0.000000e+00 : f32
    %22 = vector.broadcast %cst_15 : f32 to vector<8x16xf32>
    %23 = arith.maximumf %21, %22 : vector<8x16xf32>
    %24 = math.absf %21 : vector<8x16xf32>
    %cst_16 = arith.constant 0.000000e+00 : f32
    %25 = vector.broadcast %cst_16 : f32 to vector<8x16xf32>
    %26 = arith.subf %25, %24 : vector<8x16xf32>
    %27 = math.exp %26 : vector<8x16xf32>
    %28 = math.log1p %27 : vector<8x16xf32>
    %29 = arith.addf %23, %28 : vector<8x16xf32>
    %c0_17 = arith.constant 0 : index
    %c0_18 = arith.constant 0 : index
    %30 = vector.load %arg6[%c0_17, %c0_18] : memref<8x16xf32, #tpu.memory_space<vmem>>, vector<8x16xf32>
    tpu.vector_store %arg6[%c0_17, %c0_18], %20 {strides = array<i32>} : memref<8x16xf32, #tpu.memory_space<vmem>>, vector<8x16xf32>,
    %c0_19 = arith.constant 0 : index
    %c0_20 = arith.constant 0 : index
    %31 = vector.load %arg7[%c0_19, %c0_20] : memref<8x16xf32, #tpu.memory_space<vmem>>, vector<8x16xf32>
    tpu.vector_store %arg7[%c0_19, %c0_20], %29 {strides = array<i32>} : memref<8x16xf32, #tpu.memory_space<vmem>>, vector<8x16xf32>,
    return
  }
  func.func @transform_0(%arg0: i32) -> (i32, i32) {
    %c0_i32 = arith.constant 0 : i32
    %c0_i32_0 = arith.constant 0 : i32
    return %arg0, %c0_i32 : i32, i32
  }
  func.func @transform_1(%arg0: i32) -> (i32, i32) {
    %c0_i32 = arith.constant 0 : i32
    %c0_i32_0 = arith.constant 0 : i32
    %c0_i32_1 = arith.constant 0 : i32
    return %c0_i32, %c0_i32_0 : i32, i32
  }
  func.func @transform_2(%arg0: i32) -> (i32, i32) {
    %c0_i32 = arith.constant 0 : i32
    %c0_i32_0 = arith.constant 0 : i32
    %c0_i32_1 = arith.constant 0 : i32
    return %c0_i32, %c0_i32_0 : i32, i32
  }
  func.func @transform_3(%arg0: i32) -> (i32, i32) {
    %c0_i32 = arith.constant 0 : i32
    %c0_i32_0 = arith.constant 0 : i32
    %c0_i32_1 = arith.constant 0 : i32
    return %c0_i32, %c0_i32_0 : i32, i32
  }
  func.func @transform_4(%arg0: i32) -> (i32, i32) {
    %c0_i32 = arith.constant 0 : i32
    %c0_i32_0 = arith.constant 0 : i32
    %c0_i32_1 = arith.constant 0 : i32
    return %c0_i32, %c0_i32_0 : i32, i32
  }
  func.func @transform_5(%arg0: i32) -> (i32, i32) {
    %c0_i32 = arith.constant 0 : i32
    %c0_i32_0 = arith.constant 0 : i32
    return %arg0, %c0_i32 : i32, i32
  }
  func.func @transform_6(%arg0: i32) -> (i32, i32) {
    %c0_i32 = arith.constant 0 : i32
    %c0_i32_0 = arith.constant 0 : i32
    return %arg0, %c0_i32 : i32, i32
  }
}

</mosaic_0001>

<llo_original>
// kernel: tpu_custom_call.1
$region0: #{tpu_custom_call.1}
  #allocation0 [shape = 'u32[]', space=smem, size = 0x4, offset = 0x4, fixed_abs, tag = 'smem constant byte address 0x4 - core index']
  #allocation1 [shape = 'u32[144,128]{1,0:T(1,128)}', space=vmem, size = 0x12000, scoped, tag = 'internal scratch']
  %s0 = inlined_call_operand.hbm [shape: f32[8,32], index: 0, kind: input, shape index: {}]
  %s1 = inlined_call_operand.vmem [shape: f32[32,128], index: 1, kind: input, shape index: {}]
  %s2 = inlined_call_operand.vmem [shape: f32[128,128], index: 2, kind: input, shape index: {}]
  %s3 = inlined_call_operand.vmem [shape: f32[128,32], index: 3, kind: input, shape index: {}]
  %s4 = inlined_call_operand.vmem [shape: f32[1,384], index: 4, kind: input, shape index: {}]
  %s5 = inlined_call_operand.hbm [shape: f32[8,16], index: 5, kind: output, shape index: {0}]
  %s6 = inlined_call_operand.hbm [shape: f32[8,16], index: 6, kind: output, shape index: {1}]
  %7 = xla_tuple %s5, %s6
  %s8 = sld [smem:[#allocation0]]
  $region42: #{tpu_custom_call.1} parent=0
    _
  %s10 = ssub.s32 1, %s8
  %s11 = scalar_select 0, %s10, %s8
  $region1: #{tpu_custom_call.1} parent=0
    #allocation2 [shape = 'u8[4096]{0}', space=vmem, size = 0x1000, scoped, tag = 'input window, operand 0, single buffered']
    #allocation3 [shape = 's32[1]{0}', space=sflag, size = 0x4, scoped, tag = 'scoped memory for tpu_custom_call.1']
    #allocation4 [shape = 's32[1]{0}', space=sflag, size = 0x4, scoped, tag = 'scoped memory for tpu_custom_call.1']
    #allocation5 [shape = 'u8[4096]{0}', space=vmem, size = 0x1000, scoped, tag = 'output window, operand 0, single buffered']
    #allocation6 [shape = 'u8[4096]{0}', space=vmem, size = 0x1000, scoped, tag = 'output window, operand 1, single buffered']
    #allocation7 [shape = 's32[1]{0}', space=sflag, size = 0x4, scoped, tag = 'scoped memory for tpu_custom_call.1']
    %12 = vsyncpa [#allocation3], 0
    %13 = vsyncpa [#allocation4], 0
    %14 = vsyncpa [#allocation7], 0
    // Predicated region
    $region2: #{tpu_custom_call.1} parent=1 // pred_check
      _
    $region3: #{tpu_custom_call.1} parent=1 // pred_check_branch
      %16 = sbr.rel (0) target = $region5
    $region4: #{tpu_custom_call.1} parent=1 // pred_region
      %s18 = ssub.s32 128, 128
      %19 = vsyncadd [#allocation3], %s18
      %s21 = sshll.u32 [#allocation2], 4
      %s22 = int_to_ptr.vmem [resolvable:$true] %s21
      %24 = dma.hbm_to_vmem [thread:$0]  %s0, 128, %s22, [#allocation3]
    $region5: #{tpu_custom_call.1} parent=1 // pred_fallthru
      _
    // Predicated region
    $region6: #{tpu_custom_call.1} parent=1 // pred_check
      _
    $region7: #{tpu_custom_call.1} parent=1 // pred_check_branch
      %26 = sbr.rel (0) target = $region9
    $region8: #{tpu_custom_call.1} parent=1 // pred_region
      _
    $region9: #{tpu_custom_call.1} parent=1 // pred_fallthru
      _
    // Predicated region
    $region10: #{tpu_custom_call.1} parent=1 // pred_check
      _
    $region11: #{tpu_custom_call.1} parent=1 // pred_check_branch
      %28 = sbr.rel (0) target = $region13
    $region12: #{tpu_custom_call.1} parent=1 // pred_region
      _
    $region13: #{tpu_custom_call.1} parent=1 // pred_fallthru
      _
    // Predicated region
    $region14: #{tpu_custom_call.1} parent=1 // pred_check
      _
    $region15: #{tpu_custom_call.1} parent=1 // pred_check_branch
      %30 = sbr.rel (0) target = $region17
    $region16: #{tpu_custom_call.1} parent=1 // pred_region
      _
    $region17: #{tpu_custom_call.1} parent=1 // pred_fallthru
      _
    // Predicated region
    $region18: #{tpu_custom_call.1} parent=1 // pred_check
      _
    $region19: #{tpu_custom_call.1} parent=1 // pred_check_branch
      %32 = sbr.rel (0) target = $region21
    $region20: #{tpu_custom_call.1} parent=1 // pred_region
      _
    $region21: #{tpu_custom_call.1} parent=1 // pred_fallthru
      _
    // Predicated region
    $region22: #{tpu_custom_call.1} parent=1 // pred_check
      _
    $region23: #{tpu_custom_call.1} parent=1 // pred_check_branch
      %34 = sbr.rel (0) target = $region25
    $region24: #{tpu_custom_call.1} parent=1 // pred_region
      %35 = dma.done [#allocation3], 128
    $region25: #{tpu_custom_call.1} parent=1 // pred_fallthru
      _
    %v36 = vld [vmem:[#allocation2] sm:$0xff]
    %v37 = vld [vmem:[%s1] sm:$0xff]
    %v38 = vld [vmem:[%s1 + $0x8] sm:$0xff]
    %v39 = vld [vmem:[%s1 + $0x10] sm:$0xff]
    %v40 = vld [vmem:[%s1 + $0x18] sm:$0xff]
    %v41 = vld [vmem:[%s4] sm:$0x1]
    %v43 = vlaneseq
    %v44 = vshrl.u32 %v43, 7
    %v45 = vsub.s32 0, %v44
    %v46 = vrot.slane %v41, %v45
    %vm48 = vcmask 261120
    %v50 = vsel %vm48, %v36, 0
    %52 = vmatprep.subr.mxu0 0.0
    %53 = vmatpush1.msra.mxu0 0.0
    %54 = vmatprep.subr.mxu0 0.0
    %55 = vmatpush1.msra.mxu0 0.0
    %56 = vmatprep.subr.mxu0 0.0
    %57 = vmatpush1.msra.mxu0 0.0
    %58 = vmatprep.subr.mxu0 0.0
    %59 = vmatpush1.msra.mxu0 0.0
    %60 = vmatprep.subr.mxu0 0.0
    %61 = vmatpush1.msra.mxu0 0.0
    %62 = vmatprep.subr.mxu0 0.0
    %63 = vmatpush1.msra.mxu0 0.0
    %64 = vmatprep.subr.mxu0 0.0
    %65 = vmatpush1.msra.mxu0 0.0
    %66 = vmatprep.subr.mxu0 0.0
    %67 = vmatpush1.msra.mxu0 0.0
    %68 = vmatprep.subr.mxu0 0.0
    %69 = vmatpush1.msra.mxu0 0.0
    %70 = vmatprep.subr.mxu0 0.0
    %71 = vmatpush1.msra.mxu0 0.0
    %72 = vmatprep.subr.mxu0 0.0
    %73 = vmatpush1.msra.mxu0 0.0
    %74 = vmatprep.subr.mxu0 0.0
    %75 = vmatpush1.msra.mxu0 0.0
    %76 = vmatprep.subr.mxu0 0.0
    %77 = vmatpush1.msra.mxu0 %v40
    %78 = vmatprep.subr.mxu0 0.0
    %79 = vmatpush1.msra.mxu0 %v39
    %80 = vmatprep.subr.mxu0 0.0
    %81 = vmatpush1.msra.mxu0 %v38
    %82 = vmatprep.subr.mxu0 0.0
    %83 = vmatpush1.msra.mxu0 %v37
    %84 = vmatprep.subr.mxu0 0.0
    %85 = vmatpush2.msra.mxu0 0.0
    %86 = vmatprep.subr.mxu0 0.0
    %87 = vmatpush2.msra.mxu0 0.0
    %88 = vmatprep.subr.mxu0 0.0
    %89 = vmatpush2.msra.mxu0 0.0
    %90 = vmatprep.subr.mxu0 0.0
    %91 = vmatpush2.msra.mxu0 0.0
    %92 = vmatprep.subr.mxu0 0.0
    %93 = vmatpush2.msra.mxu0 0.0
    %94 = vmatprep.subr.mxu0 0.0
    %95 = vmatpush2.msra.mxu0 0.0
    %96 = vmatprep.subr.mxu0 0.0
    %97 = vmatpush2.msra.mxu0 0.0
    %98 = vmatprep.subr.mxu0 0.0
    %99 = vmatpush2.msra.mxu0 0.0
    %100 = vmatprep.subr.mxu0 0.0
    %101 = vmatpush2.msra.mxu0 0.0
    %102 = vmatprep.subr.mxu0 0.0
    %103 = vmatpush2.msra.mxu0 0.0
    %104 = vmatprep.subr.mxu0 0.0
    %105 = vmatpush2.msra.mxu0 0.0
    %106 = vmatprep.subr.mxu0 0.0
    %107 = vmatpush2.msra.mxu0 0.0
    %108 = vmatprep.subr.mxu0 0.0
    %109 = vmatpush2.msra.mxu0 0.0
    %110 = vmatprep.subr.mxu0 0.0
    %111 = vmatpush2.msra.mxu0 0.0
    %112 = vmatprep.subr.mxu0 0.0
    %113 = vmatpush2.msra.mxu0 0.0
    %114 = vmatprep.subr.mxu0 0.0
    %115 = vmatpush2.msra.mxu0 0.0
    %116 = vmatprep.mubr.f32.mxu0 0.0
    %117 = vmatmul.mubr.f32.gmra.mxu0 %v50
    %v118 = vpop.f32.mrf.mxu0
    %v119 = vadd.f32 %v46, %v118
    %v120 = vpop.f32.mrf.mxu0
    %121 = vdwg.mxu0
    %v122 = vmax.f32 %v119, 0.0
    %v123 = vld [vmem:[%s2] sm:$0xff]
    %v124 = vld [vmem:[%s2 + $0x8] sm:$0xff]
    %v125 = vld [vmem:[%s2 + $0x10] sm:$0xff]
    %v126 = vld [vmem:[%s2 + $0x18] sm:$0xff]
    %v127 = vld [vmem:[%s2 + $0x20] sm:$0xff]
    %v128 = vld [vmem:[%s2 + $0x28] sm:$0xff]
    %v129 = vld [vmem:[%s2 + $0x30] sm:$0xff]
    %v130 = vld [vmem:[%s2 + $0x38] sm:$0xff]
    %v131 = vld [vmem:[%s2 + $0x40] sm:$0xff]
    %v132 = vld [vmem:[%s2 + $0x48] sm:$0xff]
    %v133 = vld [vmem:[%s2 + $0x50] sm:$0xff]
    %v134 = vld [vmem:[%s2 + $0x58] sm:$0xff]
    %v135 = vld [vmem:[%s2 + $0x60] sm:$0xff]
    %v136 = vld [vmem:[%s2 + $0x68] sm:$0xff]
    %v137 = vld [vmem:[%s2 + $0x70] sm:$0xff]
    %v138 = vld [vmem:[%s2 + $0x78] sm:$0xff]
    %v139 = vld [vmem:[%s4 + $0x1] sm:$0x1]
    %v141 = vlaneseq
    %v142 = vshrl.u32 %v141, 7
    %v143 = vsub.s32 0, %v142
    %v144 = vrot.slane %v139, %v143
    %146 = vmatprep.subr.mxu0 0.0
    %147 = vmatpush1.msra.mxu0 %v138
    %148 = vmatprep.subr.mxu0 0.0
    %149 = vmatpush1.msra.mxu0 %v137
    %150 = vmatprep.subr.mxu0 0.0
    %151 = vmatpush1.msra.mxu0 %v136
    %152 = vmatprep.subr.mxu0 0.0
    %153 = vmatpush1.msra.mxu0 %v135
    %154 = vmatprep.subr.mxu0 0.0
    %155 = vmatpush1.msra.mxu0 %v134
    %156 = vmatprep.subr.mxu0 0.0
    %157 = vmatpush1.msra.mxu0 %v133
    %158 = vmatprep.subr.mxu0 0.0
    %159 = vmatpush1.msra.mxu0 %v132
    %160 = vmatprep.subr.mxu0 0.0
    %161 = vmatpush1.msra.mxu0 %v131
    %162 = vmatprep.subr.mxu0 0.0
    %163 = vmatpush1.msra.mxu0 %v130
    %164 = vmatprep.subr.mxu0 0.0
    %165 = vmatpush1.msra.mxu0 %v129
    %166 = vmatprep.subr.mxu0 0.0
    %167 = vmatpush1.msra.mxu0 %v128
    %168 = vmatprep.subr.mxu0 0.0
    %169 = vmatpush1.msra.mxu0 %v127
    %170 = vmatprep.subr.mxu0 0.0
    %171 = vmatpush1.msra.mxu0 %v126
    %172 = vmatprep.subr.mxu0 0.0
    %173 = vmatpush1.msra.mxu0 %v125
    %174 = vmatprep.subr.mxu0 0.0
    %175 = vmatpush1.msra.mxu0 %v124
    %176 = vmatprep.subr.mxu0 0.0
    %177 = vmatpush1.msra.mxu0 %v123
    %178 = vmatprep.subr.mxu0 0.0
    %179 = vmatpush2.msra.mxu0 0.0
    %180 = vmatprep.subr.mxu0 0.0
    %181 = vmatpush2.msra.mxu0 0.0
    %182 = vmatprep.subr.mxu0 0.0
    %183 = vmatpush2.msra.mxu0 0.0
    %184 = vmatprep.subr.mxu0 0.0
    %185 = vmatpush2.msra.mxu0 0.0
    %186 = vmatprep.subr.mxu0 0.0
    %187 = vmatpush2.msra.mxu0 0.0
    %188 = vmatprep.subr.mxu0 0.0
    %189 = vmatpush2.msra.mxu0 0.0
    %190 = vmatprep.subr.mxu0 0.0
    %191 = vmatpush2.msra.mxu0 0.0
    %192 = vmatprep.subr.mxu0 0.0
    %193 = vmatpush2.msra.mxu0 0.0
    %194 = vmatprep.subr.mxu0 0.0
    %195 = vmatpush2.msra.mxu0 0.0
    %196 = vmatprep.subr.mxu0 0.0
    %197 = vmatpush2.msra.mxu0 0.0
    %198 = vmatprep.subr.mxu0 0.0
    %199 = vmatpush2.msra.mxu0 0.0
    %200 = vmatprep.subr.mxu0 0.0
    %201 = vmatpush2.msra.mxu0 0.0
    %202 = vmatprep.subr.mxu0 0.0
    %203 = vmatpush2.msra.mxu0 0.0
    %204 = vmatprep.subr.mxu0 0.0
    %205 = vmatpush2.msra.mxu0 0.0
    %206 = vmatprep.subr.mxu0 0.0
    %207 = vmatpush2.msra.mxu0 0.0
    %208 = vmatprep.subr.mxu0 0.0
    %209 = vmatpush2.msra.mxu0 0.0
    %210 = vmatprep.mubr.f32.mxu0 0.0
    %211 = vmatmul.mubr.f32.gmra.mxu0 %v122
    %v212 = vpop.f32.mrf.mxu0
    %v213 = vadd.f32 %v144, %v212
    %v214 = vpop.f32.mrf.mxu0
    %215 = vdwg.mxu0
    %v216 = vmax.f32 %v213, 0.0
    %v217 = vld [vmem:[%s3] sm:$0xff]
    %v218 = vld [vmem:[%s3 + $0x8] sm:$0xff]
    %v219 = vld [vmem:[%s3 + $0x10] sm:$0xff]
    %v220 = vld [vmem:[%s3 + $0x18] sm:$0xff]
    %v221 = vld [vmem:[%s3 + $0x20] sm:$0xff]
    %v222 = vld [vmem:[%s3 + $0x28] sm:$0xff]
    %v223 = vld [vmem:[%s3 + $0x30] sm:$0xff]
    %v224 = vld [vmem:[%s3 + $0x38] sm:$0xff]
    %v225 = vld [vmem:[%s3 + $0x40] sm:$0xff]
    %v226 = vld [vmem:[%s3 + $0x48] sm:$0xff]
    %v227 = vld [vmem:[%s3 + $0x50] sm:$0xff]
    %v228 = vld [vmem:[%s3 + $0x58] sm:$0xff]
    %v229 = vld [vmem:[%s3 + $0x60] sm:$0xff]
    %v230 = vld [vmem:[%s3 + $0x68] sm:$0xff]
    %v231 = vld [vmem:[%s3 + $0x70] sm:$0xff]
    %v232 = vld [vmem:[%s3 + $0x78] sm:$0xff]
    %v233 = vld [vmem:[%s4 + $0x2] sm:$0x1]
    %v235 = vlaneseq
    %v236 = vshrl.u32 %v235, 7
    %v237 = vsub.s32 0, %v236
    %v238 = vrot.slane %v233, %v237
    %240 = vmatprep.subr.mxu0 0.0
    %241 = vmatpush1.msra.mxu0 %v232
    %242 = vmatprep.subr.mxu0 0.0
    %243 = vmatpush1.msra.mxu0 %v231
    %244 = vmatprep.subr.mxu0 0.0
    %245 = vmatpush1.msra.mxu0 %v230
    %246 = vmatprep.subr.mxu0 0.0
    %247 = vmatpush1.msra.mxu0 %v229
    %248 = vmatprep.subr.mxu0 0.0
    %249 = vmatpush1.msra.mxu0 %v228
    %250 = vmatprep.subr.mxu0 0.0
    %251 = vmatpush1.msra.mxu0 %v227
    %252 = vmatprep.subr.mxu0 0.0
    %253 = vmatpush1.msra.mxu0 %v226
    %254 = vmatprep.subr.mxu0 0.0
    %255 = vmatpush1.msra.mxu0 %v225
    %256 = vmatprep.subr.mxu0 0.0
    %257 = vmatpush1.msra.mxu0 %v224
    %258 = vmatprep.subr.mxu0 0.0
    %259 = vmatpush1.msra.mxu0 %v223
    %260 = vmatprep.subr.mxu0 0.0
    %261 = vmatpush1.msra.mxu0 %v222
    %262 = vmatprep.subr.mxu0 0.0
    %263 = vmatpush1.msra.mxu0 %v221
    %264 = vmatprep.subr.mxu0 0.0
    %265 = vmatpush1.msra.mxu0 %v220
    %266 = vmatprep.subr.mxu0 0.0
    %267 = vmatpush1.msra.mxu0 %v219
    %268 = vmatprep.subr.mxu0 0.0
    %269 = vmatpush1.msra.mxu0 %v218
    %270 = vmatprep.subr.mxu0 0.0
    %271 = vmatpush1.msra.mxu0 %v217
    %272 = vmatprep.subr.mxu0 0.0
    %273 = vmatpush2.msra.mxu0 0.0
    %274 = vmatprep.subr.mxu0 0.0
    %275 = vmatpush2.msra.mxu0 0.0
    %276 = vmatprep.subr.mxu0 0.0
    %277 = vmatpush2.msra.mxu0 0.0
    %278 = vmatprep.subr.mxu0 0.0
    %279 = vmatpush2.msra.mxu0 0.0
    %280 = vmatprep.subr.mxu0 0.0
    %281 = vmatpush2.msra.mxu0 0.0
    %282 = vmatprep.subr.mxu0 0.0
    %283 = vmatpush2.msra.mxu0 0.0
    %284 = vmatprep.subr.mxu0 0.0
    %285 = vmatpush2.msra.mxu0 0.0
    %286 = vmatprep.subr.mxu0 0.0
    %287 = vmatpush2.msra.mxu0 0.0
    %288 = vmatprep.subr.mxu0 0.0
    %289 = vmatpush2.msra.mxu0 0.0
    %290 = vmatprep.subr.mxu0 0.0
    %291 = vmatpush2.msra.mxu0 0.0
    %292 = vmatprep.subr.mxu0 0.0
    %293 = vmatpush2.msra.mxu0 0.0
    %294 = vmatprep.subr.mxu0 0.0
    %295 = vmatpush2.msra.mxu0 0.0
    %296 = vmatprep.subr.mxu0 0.0
    %297 = vmatpush2.msra.mxu0 0.0
    %298 = vmatprep.subr.mxu0 0.0
    %299 = vmatpush2.msra.mxu0 0.0
    %300 = vmatprep.subr.mxu0 0.0
    %301 = vmatpush2.msra.mxu0 0.0
    %302 = vmatprep.subr.mxu0 0.0
    %303 = vmatpush2.msra.mxu0 0.0
    %304 = vmatprep.mubr.f32.mxu0 0.0
    %305 = vmatmul.mubr.f32.gmra.mxu0 %v216
    %v306 = vpop.f32.mrf.mxu0
    %v307 = vadd.f32 %v238, %v306
    %v308 = vpop.f32.mrf.mxu0
    %309 = vdwg.mxu0
    %v310 = vmax.f32 %v307, 0.0
    %v311 = vand.u32 2147483647, %v307
    %v312 = vsub.f32 0.0, %v311
    %v313 = vmul.f32 %v312, 1.442695
    %v314 = vpow.pop %v313
    %v315 = vadd.f32 %v314, 1.0
    %v316 = vlog2.pop %v315
    %v317 = vmul.f32 %v316, 0.6931472
    %v318 = vmul.f32 -0.5, %v314
    %v319 = vadd.f32 %v318, 1.0
    %v320 = vmul.f32 %v319, %v314
    %v321 = vand.u32 2147483647, %v314
    %vm322 = vcmp.lt.f32.partialorder %v321, 0.0004427343
    %v323 = vsel %vm322, %v320, %v317
    %v324 = vadd.f32 %v310, %v323
    %vm325 = vcmask 130048
    %326 = vst.msk [vmem:[#allocation5] sm:$0xff] %vm325, %v307
    %328 = vrot.lane.b32.xlu0 %v324, 112
    %v329 = vpop.permute.xlu0 %328
    %331 = vst.msk [vmem:[#allocation6] sm:$0xff] %vm325, %v329
    // Predicated region
    $region26: #{tpu_custom_call.1} parent=1 // pred_check
      _
    $region27: #{tpu_custom_call.1} parent=1 // pred_check_branch
      %333 = sbr.rel (0) target = $region29
    $region28: #{tpu_custom_call.1} parent=1 // pred_region
      %s335 = ssub.s32 128, 128
      %336 = vsyncadd [#allocation4], %s335
      %s338 = sshll.u32 [#allocation5], 4
      %s339 = int_to_ptr.vmem [resolvable:$true] %s338
      %341 = dma.vmem_to_hbm [thread:$0]  %s339, 128, %s5, [#allocation4]
    $region29: #{tpu_custom_call.1} parent=1 // pred_fallthru
      _
    // Predicated region
    $region30: #{tpu_custom_call.1} parent=1 // pred_check
      _
    $region31: #{tpu_custom_call.1} parent=1 // pred_check_branch
      %343 = sbr.rel (0) target = $region33
    $region32: #{tpu_custom_call.1} parent=1 // pred_region
      %s345 = ssub.s32 128, 128
      %346 = vsyncadd [#allocation7], %s345
      %s348 = sshll.u32 [#allocation6], 4
      %s349 = int_to_ptr.vmem [resolvable:$true] %s348
      %351 = dma.vmem_to_hbm [thread:$0]  %s349, 128, %s6, [#allocation7]
    $region33: #{tpu_custom_call.1} parent=1 // pred_fallthru
      _
    // Predicated region
    $region34: #{tpu_custom_call.1} parent=1 // pred_check
      _
    $region35: #{tpu_custom_call.1} parent=1 // pred_check_branch
      %353 = sbr.rel (0) target = $region37
    $region36: #{tpu_custom_call.1} parent=1 // pred_region
      %354 = dma.done [#allocation4], 128
    $region37: #{tpu_custom_call.1} parent=1 // pred_fallthru
      _
    // Predicated region
    $region38: #{tpu_custom_call.1} parent=1 // pred_check
      _
    $region39: #{tpu_custom_call.1} parent=1 // pred_check_branch
      %356 = sbr.rel (0) target = $region41
    $region40: #{tpu_custom_call.1} parent=1 // pred_region
      %357 = dma.done [#allocation7], 128
    $region41: #{tpu_custom_call.1} parent=1 // pred_fallthru
      _
    %358 = vsyncpa [#allocation3], 1
    %359 = vsyncpa [#allocation4], 1
    %360 = vsyncpa [#allocation7], 1

</llo_original>
